<compile_context>
chip_gen: v5e
topology: v5e:2x2
jax: 0.10.0
libtpu: 0.0.40
codegen_flags: <defaults>
</compile_context>

<pallas_src>
import jax
import jax.numpy as jnp
from jax.experimental import pallas as pl
from jax.experimental.pallas import tpu as pltpu


def _chomp_copy_kernel(x_ref, o_ref):
    # Pure tile copy. The "chomp" is expressed entirely by the BlockSpec
    # windows (the grid only spans the first L_out elements of the input), so
    # the body is a single VMEM copy; only the final ragged L block and any
    # ragged row block use masked stores.
    o_ref[...] = x_ref[...]


def _round_up(x: int, m: int) -> int:
    return ((x + m - 1) // m) * m


def chomp1d(x: jax.Array, chomp_size: int, *,
            max_rows_block: int = 256, max_l_block: int = 2048) -> jax.Array:
    """Equivalent of PyTorch Chomp1d.forward: x[:, :, :-chomp_size].contiguous()."""
    # NOTE: PyTorch's x[:, :, :-0] returns an empty tensor; we treat
    # chomp_size == 0 as a usage error instead (intentional divergence).
    assert chomp_size > 0, "chomp_size must be positive"
    n, c, l = x.shape
    l_out = l - chomp_size
    assert l_out > 0, "chomp_size must be smaller than the sequence length"

    itemsize = jnp.dtype(x.dtype).itemsize

    # Flatten (N, C) -> (N*C,): layout-preserving merge of leading dims, so the
    # kernel sees one dense sublane axis even when C is small / odd.
    rows = n * c
    x2 = x.reshape(rows, l)

    # Dtype-aware sublane multiple: 8 rows for 32-bit, 16 for bf16, 32 for
    # int8/fp8 (packed dtypes pack along sublanes).
    sub = max(8, 32 // itemsize)
    rb = min(_round_up(rows, sub), max(_round_up(max_rows_block, sub), sub))

    # Length (lane) block: large multiple of 128 -> lane-dense stores; only the
    # final ragged block (L_out usually not 128-aligned) uses masked stores.
    lb = min(_round_up(l_out, 128), max(_round_up(max_l_block, 128), 128))

    grid = (pl.cdiv(rows, rb), pl.cdiv(l_out, lb))

    # Double-buffered input + output tiles, plus generous headroom; capped at
    # 32 MiB so it is safe on every generation (v7x physical VMEM is 64 MiB).
    block_bytes = rb * lb * itemsize
    vmem_limit = min(32 << 20, max(16 << 20, 6 * block_bytes))

    out2 = pl.pallas_call(
        _chomp_copy_kernel,
        out_shape=jax.ShapeDtypeStruct((rows, l_out), x.dtype),
        grid_spec=pltpu.PrefetchScalarGridSpec(
            num_scalar_prefetch=0,
            grid=grid,
            # Same block indices for input and output: the kept prefix of x is
            # address-aligned with the output, so indexing x directly performs
            # the chomp in the DMA window; the chomped tail is never addressed
            # except within the last partial block, whose excess lanes are
            # masked on the output store.
            in_specs=[pl.BlockSpec((rb, lb), lambda i, k: (i, k))],
            out_specs=pl.BlockSpec((rb, lb), lambda i, k: (i, k)),
        ),
        compiler_params=pltpu.CompilerParams(
            dimension_semantics=("parallel", "parallel"),
            vmem_limit_bytes=vmem_limit,
        ),
        cost_estimate=pl.CostEstimate(
            flops=0,
            transcendentals=0,
            bytes_accessed=2 * rows * l_out * itemsize,
        ),
    )(x2)

    return out2.reshape(n, c, l_out)


if __name__ == "__main__":
    key = jax.random.PRNGKey(0)

    # Small shapes consistent with Chomp1d usage inside a TCN block:
    # batch=2, channels=4, seq=16, chomp_size=3.
    N, C, L = 2, 4, 16
    chomp_size = 3
    x = jax.random.normal(key, (N, C, L), dtype=jnp.float32)

    out = chomp1d(x, chomp_size)
    out = jax.block_until_ready(out)

    ref = x[:, :, :-chomp_size]
    assert out.shape == (N, C, L - chomp_size), out.shape
    assert jnp.array_equal(out, ref), "mismatch vs reference slice"

    # Second check exercising the multi-block path (several row blocks,
    # several length blocks, ragged final blocks), still tiny.
    key2 = jax.random.PRNGKey(1)
    x2 = jax.random.normal(key2, (2, 16, 384), dtype=jnp.float32)
    out2 = jax.block_until_ready(
        chomp1d(x2, 5, max_rows_block=16, max_l_block=128))
    ref2 = x2[:, :, :-5]
    assert out2.shape == ref2.shape, out2.shape
    assert jnp.array_equal(out2, ref2), "mismatch vs reference slice (blocked case)"

    # Third check: packed dtype (bf16) with odd C, exercising the dtype-aware
    # sublane blocking and masked ragged blocks.
    key3 = jax.random.PRNGKey(2)
    x3 = jax.random.normal(key3, (2, 12, 200), dtype=jnp.bfloat16)
    out3 = jax.block_until_ready(chomp1d(x3, 7))
    ref3 = x3[:, :, :-7]
    assert out3.shape == ref3.shape, out3.shape
    assert jnp.array_equal(out3, ref3), "mismatch vs reference slice (bf16 case)"

    print("KERNEL_OK")
</pallas_src>

<mosaic_0001>
module attributes {stable_mosaic.version = 11 : i64} {
  func.func @_chomp_copy_kernel(%arg0: i32, %arg1: i32, %arg2: memref<8x128xf32, #tpu.memory_space<vmem>>, %arg3: memref<8x128xf32, #tpu.memory_space<vmem>>) attributes {dimension_semantics = [#tpu.dimension_semantics<parallel>, #tpu.dimension_semantics<parallel>], iteration_bounds = array<i64: 1, 1>, scalar_prefetch = 0 : i64, scratch_operands = 0 : i64, tpu.core_type = #tpu.core_type<tc>, window_params = [{transform_indices = @transform_0, window_bounds = array<i64: 8, 128>}, {transform_indices = @transform_1, window_bounds = array<i64: 8, 128>}]} {
    %c0 = arith.constant 0 : index
    %c0_0 = arith.constant 0 : index
    %0 = vector.load %arg2[%c0, %c0_0] : memref<8x128xf32, #tpu.memory_space<vmem>>, vector<8x128xf32>
    %c0_1 = arith.constant 0 : index
    %c0_2 = arith.constant 0 : index
    %1 = vector.load %arg3[%c0_1, %c0_2] : memref<8x128xf32, #tpu.memory_space<vmem>>, vector<8x128xf32>
    tpu.vector_store %arg3[%c0_1, %c0_2], %0 {strides = array<i32>} : memref<8x128xf32, #tpu.memory_space<vmem>>, vector<8x128xf32>,
    return
  }
  func.func @transform_0(%arg0: i32, %arg1: i32) -> (i32, i32) {
    %c0_i32 = arith.constant 0 : i32
    return %arg0, %arg1 : i32, i32
  }
  func.func @transform_1(%arg0: i32, %arg1: i32) -> (i32, i32) {
    %c0_i32 = arith.constant 0 : i32
    return %arg0, %arg1 : i32, i32
  }
}

</mosaic_0001>

<llo_original>
// kernel: tpu_custom_call.1
$region0: #{tpu_custom_call.1}
  #allocation0 [shape = 'u32[]', space=smem, size = 0x4, offset = 0x4, fixed_abs, tag = 'smem constant byte address 0x4 - core index']
  #allocation1 [shape = 'u32[72,128]{1,0:T(1,128)}', space=vmem, size = 0x9000, scoped, tag = 'internal scratch']
  %s0 = inlined_call_operand.hbm [shape: f32[8,16], index: 0, kind: input, shape index: {}]
  %s1 = inlined_call_operand.hbm [shape: f32[8,13], index: 1, kind: output, shape index: {}]
  %s2 = sld [smem:[#allocation0]]
  $region18: #{tpu_custom_call.1} parent=0
    _
  %s4 = ssub.s32 1, %s2
  %s5 = scalar_select 0, %s4, %s2
  $region1: #{tpu_custom_call.1} parent=0
    #allocation2 [shape = 'u8[4096]{0}', space=vmem, size = 0x1000, scoped, tag = 'input window, operand 0, single buffered']
    #allocation3 [shape = 's32[1]{0}', space=sflag, size = 0x4, scoped, tag = 'scoped memory for tpu_custom_call.1']
    #allocation4 [shape = 's32[1]{0}', space=sflag, size = 0x4, scoped, tag = 'scoped memory for tpu_custom_call.1']
    #allocation5 [shape = 'u8[4096]{0}', space=vmem, size = 0x1000, scoped, tag = 'output window, operand 0, single buffered']
    %6 = vsyncpa [#allocation3], 0
    %7 = vsyncpa [#allocation4], 0
    // Predicated region
    $region2: #{tpu_custom_call.1} parent=1 // pred_check
      _
    $region3: #{tpu_custom_call.1} parent=1 // pred_check_branch
      %9 = sbr.rel (0) target = $region5
    $region4: #{tpu_custom_call.1} parent=1 // pred_region
      %11 = vsyncadd [#allocation3], 0
      %s13 = sshll.u32 %s0, 4
      %s14 = int_to_ptr.hbm [resolvable:$true] %s13
      %s15 = sshll.u32 [#allocation2], 4
      %s16 = int_to_ptr.vmem [resolvable:$true] %s15
      %18 = dma.hbm_to_vmem [thread:$0]  %s14, 128, %s16, [#allocation3]
    $region5: #{tpu_custom_call.1} parent=1 // pred_fallthru
      _
    // Predicated region
    $region6: #{tpu_custom_call.1} parent=1 // pred_check
      _
    $region7: #{tpu_custom_call.1} parent=1 // pred_check_branch
      %20 = sbr.rel (0) target = $region9
    $region8: #{tpu_custom_call.1} parent=1 // pred_region
      %22 = dma.done [#allocation3], 128
    $region9: #{tpu_custom_call.1} parent=1 // pred_fallthru
      _
    %v23 = vld [vmem:[#allocation2] sm:$0xff]
    %24 = vst [vmem:[#allocation5] sm:$0xff] %v23
    // Predicated region
    $region10: #{tpu_custom_call.1} parent=1 // pred_check
      _
    $region11: #{tpu_custom_call.1} parent=1 // pred_check_branch
      %26 = sbr.rel (0) target = $region13
    $region12: #{tpu_custom_call.1} parent=1 // pred_region
      %28 = vsyncadd [#allocation4], 0
      %s30 = sshll.u32 [#allocation5], 4
      %s31 = int_to_ptr.vmem [resolvable:$true] %s30
      %s32 = sshll.u32 %s1, 4
      %s33 = int_to_ptr.hbm [resolvable:$true] %s32
      %35 = dma.vmem_to_hbm [thread:$0]  %s31, 128, %s33, [#allocation4]
    $region13: #{tpu_custom_call.1} parent=1 // pred_fallthru
      _
    // Predicated region
    $region14: #{tpu_custom_call.1} parent=1 // pred_check
      _
    $region15: #{tpu_custom_call.1} parent=1 // pred_check_branch
      %37 = sbr.rel (0) target = $region17
    $region16: #{tpu_custom_call.1} parent=1 // pred_region
      %39 = dma.done [#allocation4], 128
    $region17: #{tpu_custom_call.1} parent=1 // pred_fallthru
      _
    %40 = vsyncpa [#allocation3], 1
    %41 = vsyncpa [#allocation4], 1

</llo_original>
